<compile_context>
chip_gen: v5e
topology: v5e:2x2
jax: 0.10.0
libtpu: 0.0.40
codegen_flags: <defaults>
</compile_context>

<pallas_src>
import functools

import jax
import jax.numpy as jnp
from jax import lax
from jax.experimental import pallas as pl
from jax.experimental.pallas import tpu as pltpu


_SLAB_W = 8 * 128          # lane/sublane-dense slab width for logits/labels
_PAD_LOGIT = -1e9          # BCE-neutral pad: bce(x=-1e9, y=0) == 0 exactly in f32


def _fusion_loss_kernel(n, tm, tiles_per_core, n_cols, win, use_window,
                        logits_ref, labels_ref, sim_ref, out_ref, acc_ref):
    c = pl.program_id(0)               # core-split axis ("parallel")
    t = pl.program_id(1)               # row-tile axis   ("arbitrary", accumulated)
    last_t = pl.num_programs(1) - 1
    inv_n = 1.0 / jnp.float32(n)

    @pl.when(t == 0)
    def _init():
        acc_ref[...] = jnp.zeros_like(acc_ref)

    # BCE-with-logits (sum) runs exactly once, on core 0's FIRST step, so its compute
    # hides under the streaming of subsequent sim stripes instead of the epilogue.
    @pl.when(jnp.logical_and(c == 0, t == 0))
    def _bce():
        x = logits_ref[...]                            # (slab_rows, 1024) f32
        y = labels_ref[...]                            # (slab_rows, 1024) f32
        bce = jnp.maximum(x, 0.0) - x * y + jnp.log1p(jnp.exp(-jnp.abs(x)))
        acc_ref[0:1, 0:1] += jnp.sum(bce).reshape(1, 1)

    # ---- contrastive CE tile: accumulate per-row logsumexp(row) - row[diag] ----
    sv = sim_ref[...]                                  # native dtype (bf16 stays bf16)
    tile_id = c * tiles_per_core + t                   # logical tile id
    row_in_tile = lax.broadcasted_iota(jnp.int32, (tm, 1), 0)
    global_row = tile_id * tm + row_in_tile            # (tm, 1)
    valid_row = global_row < n                         # masks padded / duplicate rows

    # Max in the native dtype (exact for bf16); f32 upcast fuses into the exp chain
    # instead of materializing a full-stripe f32 temporary bound to several uses.
    row_max = jnp.max(sv, axis=-1, keepdims=True).astype(jnp.float32)
    sum_exp = jnp.sum(jnp.exp(sv.astype(jnp.float32) - row_max),
                      axis=-1, keepdims=True)
    lse = row_max + jnp.log(sum_exp)
    # TODO(synk): if a v7x bundle dump shows the VALU/XLU slot binding, offload this
    # row sum-of-exp to the idle MXU via a (tm,C)x(C,1) ones matmul (zero masked rows first).

    # Diagonal via a narrow 128-lane-aligned column window around the diagonal
    # (avoids a full-width iota/select/reduce pass); full width for small C.
    if use_window:
        tile_start = tile_id * tm
        start = (tile_start // 128) * 128
        start = jnp.maximum(jnp.minimum(start, n_cols - win), 0)
        start = pl.multiple_of(start, 128)             # wrapper guarantees C % 128 == 0
        sw = sim_ref[:, pl.ds(start, win)]             # (tm, win), native dtype
        cols = start + lax.broadcasted_iota(jnp.int32, (tm, win), 1)
    else:
        sw = sv
        cols = lax.broadcasted_iota(jnp.int32, (tm, n_cols), 1)
    zero = jnp.zeros((), sw.dtype)
    diag = jnp.sum(jnp.where(cols == global_row, sw, zero),
                   axis=-1, keepdims=True).astype(jnp.float32)

    acc_ref[...] += jnp.where(valid_row, lse - diag, 0.0)

    # ---- finalize this core's partial sum exactly once ----
    @pl.when(t == last_t)
    def _finalize():
        total = jnp.sum(acc_ref[...], keepdims=True)   # (1, 1), single XLU reduce
        out_ref[...] = (total * inv_n).reshape(1, 1, 1)


def _vmem_plan():
    """(vmem_limit_bytes, data_budget_bytes) sized per TPU generation."""
    try:
        cap = pltpu.get_tpu_info().vmem_capacity_bytes
    except Exception:
        cap = 64 << 20                      # conservative fallback (v7x-sized)
    if cap >= (96 << 20):                   # v5e / v6e: 128 MiB physical VMEM
        return 64 << 20, 48 << 20
    return 40 << 20, 26 << 20               # v7x: 64 MiB per TensorCore


def _default_core_splits():
    try:
        if "v7" in jax.devices()[0].device_kind.lower():
            return 2                        # v7x: 2 TensorCores per chip
    except Exception:
        pass
    return 1                                # v5e / v6e: single TensorCore


def cross_entropy_fusion_loss(logits, cosin_similarity, labels,
                              *, tm=None, num_core_splits=None):
    """predicts = (logits, cosin_similarity), targets = labels; returns scalar f32."""
    n = int(labels.reshape(-1).shape[0])
    n_rows, n_cols = cosin_similarity.shape
    assert n_rows == n, "cosin_similarity rows must equal number of labels"
    assert n_cols >= n_rows, "need >= N similarity columns (CE targets are arange(N))"

    # Keep the big (N, C) stream at its native dtype (bf16 stays bf16 in the DMA).
    sim = cosin_similarity

    # Lane/sublane-dense (rows, 1024) f32 slabs for logits/labels; padding uses a
    # BCE-neutral sentinel so padded entries contribute exactly 0 to the sum.
    pad = (-n) % _SLAB_W
    slab_rows = (n + pad) // _SLAB_W
    x_flat = logits.reshape(-1).astype(jnp.float32)
    y_flat = labels.reshape(-1).astype(jnp.float32)
    logits_slab = jnp.pad(x_flat, (0, pad),
                          constant_values=_PAD_LOGIT).reshape(slab_rows, _SLAB_W)
    labels_slab = jnp.pad(y_flat, (0, pad),
                          constant_values=0.0).reshape(slab_rows, _SLAB_W)

    vmem_limit, budget = _vmem_plan()

    # Row-tile size: account for ALL VMEM users — sim double buffer (native dtype),
    # f32 temporaries (exp chain / diag window), accumulator, double-buffered slabs.
    if tm is None:
        itemsize = jnp.dtype(sim.dtype).itemsize
        per_row = n_cols * (2 * itemsize + 8) + 1024
        fixed = 2 * 2 * slab_rows * _SLAB_W * 4
        raw = (budget - fixed) // per_row
        tm = int(max(16, min(1024, (raw // 16) * 16)))
    tm = int(tm)
    if tm >= n_rows:
        tm = int(n_rows)                    # single full-height tile (full-dim block)
    else:
        tm = max(8, (tm // 8) * 8)          # (8, 128) sublane constraint

    num_tiles = -(-n_rows // tm)
    if num_core_splits is None:
        num_core_splits = _default_core_splits()
    nc = int(max(1, min(num_core_splits, num_tiles)))   # 2 only on v7x (2 TCs)
    tiles_per_core = -(-num_tiles // nc)

    # Narrow diagonal window: multiple of 128, >= tm + 128. Used only when strictly
    # narrower than C and 128-alignment of its start is provable (C % 128 == 0).
    win = ((tm + 127) // 128) * 128 + 128
    use_window = (n_cols % 128 == 0) and (win < n_cols)

    def sim_index_map(c, t):
        # Clamp so over-assigned (duplicate) tiles never index out of bounds;
        # their rows are masked in-kernel via `global_row < n`.
        return (jnp.minimum(c * tiles_per_core + t, num_tiles - 1), 0)

    kernel = functools.partial(_fusion_loss_kernel, n, tm, tiles_per_core,
                               n_cols, win, use_window)

    partials = pl.pallas_call(
        kernel,
        out_shape=jax.ShapeDtypeStruct((nc, 1, 1), jnp.float32),
        grid_spec=pltpu.PrefetchScalarGridSpec(
            num_scalar_prefetch=0,
            grid=(nc, tiles_per_core),
            in_specs=[
                # TODO(synk): pipeline_mode=pl.Buffered(1) would halve these two small
                # buffers (constant index_map); skipped — dense slabs are already tiny.
                pl.BlockSpec((slab_rows, _SLAB_W), lambda c, t: (0, 0)),   # logits slab
                pl.BlockSpec((slab_rows, _SLAB_W), lambda c, t: (0, 0)),   # labels slab
                pl.BlockSpec((tm, n_cols), sim_index_map),                 # pipelined stripe
            ],
            out_specs=pl.BlockSpec((1, 1, 1), lambda c, t: (c, 0, 0)),
            scratch_shapes=[pltpu.VMEM((tm, 1), jnp.float32)],
        ),
        compiler_params=pltpu.CompilerParams(
            dimension_semantics=("parallel", "arbitrary"),
            vmem_limit_bytes=vmem_limit),
    )(logits_slab, labels_slab, sim)

    return jnp.sum(partials)


def _reference(logits, cosin_similarity, labels):
    x = logits.reshape(-1).astype(jnp.float32)
    y = labels.reshape(-1).astype(jnp.float32)
    bce = jnp.mean(jnp.maximum(x, 0.0) - x * y + jnp.log1p(jnp.exp(-jnp.abs(x))))
    s = cosin_similarity.astype(jnp.float32)
    n = y.shape[0]
    lse = jax.scipy.special.logsumexp(s, axis=-1)
    diag = s[jnp.arange(n), jnp.arange(n)]
    return bce + jnp.mean(lse - diag)


if __name__ == "__main__":
    key = jax.random.PRNGKey(0)

    # Test 1: tiny f32 batch — single tile, full-width diag path.
    n1 = 8
    k1, k2, k3, key = jax.random.split(key, 4)
    logits1 = jax.random.normal(k1, (n1, 1), dtype=jnp.float32)
    labels1 = jax.random.bernoulli(k2, 0.5, (n1,)).astype(jnp.float32)
    sim1 = jax.random.normal(k3, (n1, n1), dtype=jnp.float32)
    loss1 = cross_entropy_fusion_loss(logits1, sim1, labels1)
    jax.block_until_ready(loss1)
    ref1 = _reference(logits1, sim1, labels1)
    assert jnp.allclose(loss1, ref1, atol=2e-5, rtol=2e-5), (loss1, ref1)

    # Test 2: bf16 similarity, explicit small tm, forced 2-way core split with an
    # uneven last tile and a clamped duplicate tile (exercises all masking paths).
    n2 = 104
    k1, k2, k3, key = jax.random.split(key, 4)
    logits2 = jax.random.normal(k1, (n2, 1), dtype=jnp.float32)
    labels2 = jax.random.bernoulli(k2, 0.5, (n2,)).astype(jnp.float32)
    sim2 = jax.random.normal(k3, (n2, n2), dtype=jnp.float32).astype(jnp.bfloat16)
    loss2 = cross_entropy_fusion_loss(logits2, sim2, labels2, tm=16,
                                      num_core_splits=2)
    jax.block_until_ready(loss2)
    ref2 = _reference(logits2, sim2, labels2)
    assert jnp.allclose(loss2, ref2, atol=2e-4, rtol=2e-4), (loss2, ref2)

    # Test 3: 128-aligned shape with multiple tiles — exercises the narrow
    # diagonal-window path (win=256 < C=512) including the clamped last window.
    n3 = 512
    k1, k2, k3, key = jax.random.split(key, 4)
    logits3 = jax.random.normal(k1, (n3, 1), dtype=jnp.float32)
    labels3 = jax.random.bernoulli(k2, 0.5, (n3,)).astype(jnp.float32)
    sim3 = jax.random.normal(k3, (n3, n3), dtype=jnp.float32)
    loss3 = cross_entropy_fusion_loss(logits3, sim3, labels3, tm=128)
    jax.block_until_ready(loss3)
    ref3 = _reference(logits3, sim3, labels3)
    assert jnp.allclose(loss3, ref3, atol=2e-5, rtol=2e-5), (loss3, ref3)

    print("KERNEL_OK")
</pallas_src>

<mosaic_0001>
module attributes {stable_mosaic.version = 11 : i64} {
  func.func @_fusion_loss_kernel(%arg0: i32, %arg1: i32, %arg2: memref<1x1024xf32, #tpu.memory_space<vmem>>, %arg3: memref<1x1024xf32, #tpu.memory_space<vmem>>, %arg4: memref<8x8xf32, #tpu.memory_space<vmem>>, %arg5: memref<1x1x1xf32, #tpu.memory_space<vmem>>, %arg6: memref<8x1xf32, #tpu.memory_space<vmem>>) attributes {dimension_semantics = [#tpu.dimension_semantics<parallel>, #tpu.dimension_semantics<arbitrary>], iteration_bounds = array<i64: 1, 1>, scalar_prefetch = 0 : i64, scratch_operands = 1 : i64, tpu.core_type = #tpu.core_type<tc>, window_params = [{pipeline_mode = #tpu.pipeline_mode<synchronous>, transform_indices = @transform_0, window_bounds = array<i64: 1, 1024>}, {pipeline_mode = #tpu.pipeline_mode<synchronous>, transform_indices = @transform_1, window_bounds = array<i64: 1, 1024>}, {transform_indices = @transform_2, window_bounds = array<i64: 8, 8>}, {transform_indices = @transform_3, window_bounds = array<i64: 1, 1, 1>}]} {
    %cst = arith.constant 1.000000e+00 : f32
    %cst_0 = arith.constant 8.000000e+00 : f32
    %0 = arith.divf %cst, %cst_0 : f32
    %c0_i32 = arith.constant 0 : i32
    %1 = arith.cmpi eq, %arg1, %c0_i32 : i32
    %2 = arith.extui %1 : i1 to i32
    %c0_i32_1 = arith.constant 0 : i32
    %3 = arith.cmpi ne, %2, %c0_i32_1 : i32
    scf.if %3 {
      %cst_18 = arith.constant 0.000000e+00 : f32
      %43 = vector.broadcast %cst_18 : f32 to vector<8x1xf32>
      %c0_19 = arith.constant 0 : index
      %c0_20 = arith.constant 0 : index
      %44 = vector.load %arg6[%c0_19, %c0_20] : memref<8x1xf32, #tpu.memory_space<vmem>>, vector<8x1xf32>
      tpu.vector_store %arg6[%c0_19, %c0_20], %43 {strides = array<i32>} : memref<8x1xf32, #tpu.memory_space<vmem>>, vector<8x1xf32>,
    } else {
    }
    %c0_i32_2 = arith.constant 0 : i32
    %4 = arith.cmpi eq, %arg0, %c0_i32_2 : i32
    %c0_i32_3 = arith.constant 0 : i32
    %5 = arith.cmpi eq, %arg1, %c0_i32_3 : i32
    %6 = arith.andi %4, %5 : i1
    %7 = arith.extui %6 : i1 to i32
    %c0_i32_4 = arith.constant 0 : i32
    %8 = arith.cmpi ne, %7, %c0_i32_4 : i32
    scf.if %8 {
      %c0_18 = arith.constant 0 : index
      %c0_19 = arith.constant 0 : index
      %43 = vector.load %arg2[%c0_18, %c0_19] : memref<1x1024xf32, #tpu.memory_space<vmem>>, vector<1x1024xf32>
      %c0_20 = arith.constant 0 : index
      %c0_21 = arith.constant 0 : index
      %44 = vector.load %arg3[%c0_20, %c0_21] : memref<1x1024xf32, #tpu.memory_space<vmem>>, vector<1x1024xf32>
      %cst_22 = arith.constant 0.000000e+00 : f32
      %45 = vector.broadcast %cst_22 : f32 to vector<1x1024xf32>
      %46 = arith.maximumf %43, %45 : vector<1x1024xf32>
      %47 = arith.mulf %43, %44 : vector<1x1024xf32>
      %48 = arith.subf %46, %47 : vector<1x1024xf32>
      %49 = math.absf %43 : vector<1x1024xf32>
      %cst_23 = arith.constant 0.000000e+00 : f32
      %50 = vector.broadcast %cst_23 : f32 to vector<1x1024xf32>
      %51 = arith.subf %50, %49 : vector<1x1024xf32>
      %52 = math.exp %51 : vector<1x1024xf32>
      %53 = math.log1p %52 : vector<1x1024xf32>
      %54 = arith.addf %48, %53 : vector<1x1024xf32>
      %c0_24 = arith.constant 0 : index
      %c0_25 = arith.constant 0 : index
      %55 = vector.load %arg6[%c0_24, %c0_25] : memref<8x1xf32, #tpu.memory_space<vmem>>, vector<1x1xf32>
      %56 = vector.shape_cast %54 : vector<1x1024xf32> to vector<1x1x1024xf32>
      %cst_26 = arith.constant dense<0.000000e+00> : vector<1xf32>
      %57 = vector.multi_reduction <add>, %56, %cst_26 [1, 2] : vector<1x1x1024xf32> to vector<1xf32>
      %58 = vector.shape_cast %57 : vector<1xf32> to vector<1x1x1xf32>
      %59 = vector.extract %58[0, 0, 0] : f32 from vector<1x1x1xf32>
      %60 = vector.broadcast %59 : f32 to vector<1x1xf32>
      %61 = arith.addf %55, %60 : vector<1x1xf32>
      %c0_27 = arith.constant 0 : index
      %c0_28 = arith.constant 0 : index
      %62 = vector.load %arg6[%c0_27, %c0_28] : memref<8x1xf32, #tpu.memory_space<vmem>>, vector<1x1xf32>
      tpu.vector_store %arg6[%c0_27, %c0_28], %61 {strides = array<i32>} : memref<8x1xf32, #tpu.memory_space<vmem>>, vector<1x1xf32>,
    } else {
    }
    %c0 = arith.constant 0 : index
    %c0_5 = arith.constant 0 : index
    %9 = vector.load %arg4[%c0, %c0_5] : memref<8x8xf32, #tpu.memory_space<vmem>>, vector<8x8xf32>
    %c1_i32 = arith.constant 1 : i32
    %10 = arith.muli %arg0, %c1_i32 : i32
    %11 = arith.addi %10, %arg1 : i32
    %12 = tpu.iota {dimensions = array<i32: 0>} : vector<8x1xi32>
    %c8_i32 = arith.constant 8 : i32
    %13 = arith.muli %11, %c8_i32 : i32
    %14 = vector.broadcast %13 : i32 to vector<8x1xi32>
    %15 = arith.addi %14, %12 : vector<8x1xi32>
    %c8_i32_6 = arith.constant 8 : i32
    %16 = vector.broadcast %c8_i32_6 : i32 to vector<8x1xi32>
    %17 = arith.cmpi slt, %15, %16 : vector<8x1xi32>
    %cst_7 = arith.constant dense<0xFF800000> : vector<8xf32>
    %18 = vector.multi_reduction <maximumf>, %9, %cst_7 [1] : vector<8x8xf32> to vector<8xf32>
    %19 = vector.shape_cast %18 : vector<8xf32> to vector<8x1xf32>
    %20 = vector.broadcast %19 : vector<8x1xf32> to vector<8x8xf32>
    %21 = arith.subf %9, %20 : vector<8x8xf32>
    %22 = math.exp %21 : vector<8x8xf32>
    %cst_8 = arith.constant dense<0.000000e+00> : vector<8xf32>
    %23 = vector.multi_reduction <add>, %22, %cst_8 [1] : vector<8x8xf32> to vector<8xf32>
    %24 = vector.shape_cast %23 : vector<8xf32> to vector<8x1xf32>
    %25 = math.log %24 : vector<8x1xf32>
    %26 = arith.addf %19, %25 : vector<8x1xf32>
    %27 = tpu.iota {dimensions = array<i32: 1>} : vector<8x8xi32>
    %28 = vector.broadcast %15 : vector<8x1xi32> to vector<8x8xi32>
    %29 = arith.cmpi eq, %27, %28 : vector<8x8xi32>
    %cst_9 = arith.constant 0.000000e+00 : f32
    %30 = vector.broadcast %cst_9 : f32 to vector<8x8xf32>
    %31 = arith.select %29, %9, %30 : vector<8x8xi1>, vector<8x8xf32>
    %cst_10 = arith.constant dense<0.000000e+00> : vector<8xf32>
    %32 = vector.multi_reduction <add>, %31, %cst_10 [1] : vector<8x8xf32> to vector<8xf32>
    %33 = vector.shape_cast %32 : vector<8xf32> to vector<8x1xf32>
    %c0_11 = arith.constant 0 : index
    %c0_12 = arith.constant 0 : index
    %34 = vector.load %arg6[%c0_11, %c0_12] : memref<8x1xf32, #tpu.memory_space<vmem>>, vector<8x1xf32>
    %35 = arith.subf %26, %33 : vector<8x1xf32>
    %cst_13 = arith.constant 0.000000e+00 : f32
    %36 = vector.broadcast %cst_13 : f32 to vector<8x1xf32>
    %37 = arith.select %17, %35, %36 : vector<8x1xi1>, vector<8x1xf32>
    %38 = arith.addf %34, %37 : vector<8x1xf32>
    %c0_14 = arith.constant 0 : index
    %c0_15 = arith.constant 0 : index
    %39 = vector.load %arg6[%c0_14, %c0_15] : memref<8x1xf32, #tpu.memory_space<vmem>>, vector<8x1xf32>
    tpu.vector_store %arg6[%c0_14, %c0_15], %38 {strides = array<i32>} : memref<8x1xf32, #tpu.memory_space<vmem>>, vector<8x1xf32>,
    %c0_i32_16 = arith.constant 0 : i32
    %40 = arith.cmpi eq, %arg1, %c0_i32_16 : i32
    %41 = arith.extui %40 : i1 to i32
    %c0_i32_17 = arith.constant 0 : i32
    %42 = arith.cmpi ne, %41, %c0_i32_17 : i32
    scf.if %42 {
      %c0_18 = arith.constant 0 : index
      %c0_19 = arith.constant 0 : index
      %43 = vector.load %arg6[%c0_18, %c0_19] : memref<8x1xf32, #tpu.memory_space<vmem>>, vector<8x1xf32>
      %44 = vector.shape_cast %43 : vector<8x1xf32> to vector<1x8x1xf32>
      %cst_20 = arith.constant dense<0.000000e+00> : vector<1xf32>
      %45 = vector.multi_reduction <add>, %44, %cst_20 [1, 2] : vector<1x8x1xf32> to vector<1xf32>
      %46 = vector.shape_cast %45 : vector<1xf32> to vector<1x1x1xf32>
      %47 = vector.extract %46[0, 0, 0] : f32 from vector<1x1x1xf32>
      %48 = vector.broadcast %47 : f32 to vector<1x1xf32>
      %49 = vector.broadcast %0 : f32 to vector<1x1xf32>
      %50 = arith.mulf %48, %49 : vector<1x1xf32>
      %51 = vector.shape_cast %50 : vector<1x1xf32> to vector<1x1x1xf32>
      %c0_21 = arith.constant 0 : index
      %c0_22 = arith.constant 0 : index
      %c0_23 = arith.constant 0 : index
      %52 = vector.load %arg5[%c0_21, %c0_22, %c0_23] : memref<1x1x1xf32, #tpu.memory_space<vmem>>, vector<1x1x1xf32>
      tpu.vector_store %arg5[%c0_21, %c0_22, %c0_23], %51 {strides = array<i32>} : memref<1x1x1xf32, #tpu.memory_space<vmem>>, vector<1x1x1xf32>,
    } else {
    }
    return
  }
  func.func @transform_0(%arg0: i32, %arg1: i32) -> (i32, i32) {
    %c0_i32 = arith.constant 0 : i32
    %c0_i32_0 = arith.constant 0 : i32
    %c0_i32_1 = arith.constant 0 : i32
    return %c0_i32, %c0_i32_0 : i32, i32
  }
  func.func @transform_1(%arg0: i32, %arg1: i32) -> (i32, i32) {
    %c0_i32 = arith.constant 0 : i32
    %c0_i32_0 = arith.constant 0 : i32
    %c0_i32_1 = arith.constant 0 : i32
    return %c0_i32, %c0_i32_0 : i32, i32
  }
  func.func @transform_2(%arg0: i32, %arg1: i32) -> (i32, i32) {
    %c1_i32 = arith.constant 1 : i32
    %0 = arith.muli %arg0, %c1_i32 : i32
    %1 = arith.addi %0, %arg1 : i32
    %c0_i32 = arith.constant 0 : i32
    %2 = arith.minsi %1, %c0_i32 : i32
    %c0_i32_0 = arith.constant 0 : i32
    %c0_i32_1 = arith.constant 0 : i32
    return %2, %c0_i32_0 : i32, i32
  }
  func.func @transform_3(%arg0: i32, %arg1: i32) -> (i32, i32, i32) {
    %c0_i32 = arith.constant 0 : i32
    %c0_i32_0 = arith.constant 0 : i32
    %c0_i32_1 = arith.constant 0 : i32
    return %arg0, %c0_i32, %c0_i32_0 : i32, i32, i32
  }
}

</mosaic_0001>

<llo_original>
// kernel: tpu_custom_call.1
$region0: #{tpu_custom_call.1}
  #allocation0 [shape = 'u32[]', space=smem, size = 0x4, offset = 0x4, fixed_abs, tag = 'smem constant byte address 0x4 - core index']
  #allocation1 [shape = 'u32[72,128]{1,0:T(1,128)}', space=vmem, size = 0x9000, scoped, tag = 'internal scratch']
  #allocation2 [shape = 'f32[8,1]{1,0:T(8,128)}', space=vmem, size = 0x1000, scoped, tag = 'scratch operand']
  %s0 = inlined_call_operand.hbm [shape: f32[1,1024], index: 0, kind: input, shape index: {}]
  %s1 = inlined_call_operand.hbm [shape: f32[1,1024], index: 1, kind: input, shape index: {}]
  %s2 = inlined_call_operand.hbm [shape: f32[8,8], index: 2, kind: input, shape index: {}]
  %s3 = inlined_call_operand.hbm [shape: f32[1,1,1], index: 3, kind: output, shape index: {}]
  %s4 = sld [smem:[#allocation0]]
  $region46: #{tpu_custom_call.1} parent=0
    _
  %s6 = ssub.s32 1, %s4
  %s7 = scalar_select 0, %s6, %s4
  $region1: #{tpu_custom_call.1} parent=0
    #allocation3 [shape = 'u8[4096]{0}', space=vmem, size = 0x1000, scoped, tag = 'input window, operand 0, single buffered']
    #allocation4 [shape = 's32[1]{0}', space=sflag, size = 0x4, scoped, tag = 'scoped memory for tpu_custom_call.1']
    #allocation5 [shape = 's32[1]{0}', space=sflag, size = 0x4, scoped, tag = 'scoped memory for tpu_custom_call.1']
    #allocation6 [shape = 'u8[4096]{0}', space=vmem, size = 0x1000, scoped, tag = 'input window, operand 1, single buffered']
    #allocation7 [shape = 's32[1]{0}', space=sflag, size = 0x4, scoped, tag = 'scoped memory for tpu_custom_call.1']
    #allocation8 [shape = 'u8[4096]{0}', space=vmem, size = 0x1000, scoped, tag = 'input window, operand 2, single buffered']
    #allocation9 [shape = 'u8[512]{0}', space=vmem, size = 0x400, scoped, tag = 'output window, operand 0, single buffered']
    %8 = vsyncpa [#allocation4], 0
    %9 = vsyncpa [#allocation7], 0
    %10 = vsyncpa [#allocation5], 0
    // Predicated region
    $region2: #{tpu_custom_call.1} parent=1 // pred_check
      _
    $region3: #{tpu_custom_call.1} parent=1 // pred_check_branch
      %12 = sbr.rel (0) target = $region5
    $region4: #{tpu_custom_call.1} parent=1 // pred_region
      %14 = vsyncadd [#allocation4], 0
      %s16 = sshll.u32 %s0, 4
      %s17 = int_to_ptr.hbm [resolvable:$true] %s16
      %s18 = sshll.u32 [#allocation3], 4
      %s19 = int_to_ptr.vmem [resolvable:$true] %s18
      %21 = dma.hbm_to_vmem [thread:$0]  %s17, 128, %s19, [#allocation4]
    $region5: #{tpu_custom_call.1} parent=1 // pred_fallthru
      _
    // Predicated region
    $region6: #{tpu_custom_call.1} parent=1 // pred_check
      _
    $region7: #{tpu_custom_call.1} parent=1 // pred_check_branch
      %23 = sbr.rel (0) target = $region9
    $region8: #{tpu_custom_call.1} parent=1 // pred_region
      %25 = vsyncadd [#allocation7], 0
      %s27 = sshll.u32 %s1, 4
      %s28 = int_to_ptr.hbm [resolvable:$true] %s27
      %s29 = sshll.u32 [#allocation6], 4
      %s30 = int_to_ptr.vmem [resolvable:$true] %s29
      %32 = dma.hbm_to_vmem [thread:$0]  %s28, 128, %s30, [#allocation7]
    $region9: #{tpu_custom_call.1} parent=1 // pred_fallthru
      _
    // Predicated region
    $region10: #{tpu_custom_call.1} parent=1 // pred_check
      _
    $region11: #{tpu_custom_call.1} parent=1 // pred_check_branch
      %34 = sbr.rel (0) target = $region13
    $region12: #{tpu_custom_call.1} parent=1 // pred_region
      %s35 = sadd.s32 0, 0
      %p36 = scmp.lt.s32.totalorder %s35, 0
      %s37 = scalar_select %p36, %s35, 0
      %39 = vsyncadd [#allocation7], 0
      %s40 = smul.addr %s37, 8
      %s41 = scalar_lea.hbm %s2, %s40
      %s43 = sshll.u32 %s41, 4
      %s44 = int_to_ptr.hbm [resolvable:$true] %s43
      %s45 = sshll.u32 [#allocation8], 4
      %s46 = int_to_ptr.vmem [resolvable:$true] %s45
      %48 = dma.hbm_to_vmem [thread:$0]  %s44, 128, %s46, [#allocation7]
    $region13: #{tpu_custom_call.1} parent=1 // pred_fallthru
      _
    // Predicated region
    $region14: #{tpu_custom_call.1} parent=1 // pred_check
      _
    $region15: #{tpu_custom_call.1} parent=1 // pred_check_branch
      %50 = sbr.rel (0) target = $region17
    $region16: #{tpu_custom_call.1} parent=1 // pred_region
      %52 = dma.done [#allocation4], 128
    $region17: #{tpu_custom_call.1} parent=1 // pred_fallthru
      _
    // Predicated region
    $region18: #{tpu_custom_call.1} parent=1 // pred_check
      _
    $region19: #{tpu_custom_call.1} parent=1 // pred_check_branch
      %54 = sbr.rel (0) target = $region21
    $region20: #{tpu_custom_call.1} parent=1 // pred_region
      %56 = dma.done [#allocation7], 128
    $region21: #{tpu_custom_call.1} parent=1 // pred_fallthru
      _
    // Predicated region
    $region22: #{tpu_custom_call.1} parent=1 // pred_check
      _
    $region23: #{tpu_custom_call.1} parent=1 // pred_check_branch
      %58 = sbr.rel (0) target = $region25
    $region24: #{tpu_custom_call.1} parent=1 // pred_region
      %60 = dma.done [#allocation7], 128
    $region25: #{tpu_custom_call.1} parent=1 // pred_fallthru
      _
    %s61 = sadd.s32 0, 0
    %p62 = scmp.lt.s32.totalorder %s61, 0
    %s63 = scalar_select %p62, %s61, 0
    %p64 = scmp.eq.s32.totalorder 0, 0
    // Predicated region
    $region26: #{tpu_custom_call.1} parent=1 // pred_check
      %p65 = pneg %p64
    $region27: #{tpu_custom_call.1} parent=1 // pred_check_branch
      %67 = sbr.rel (%p65) target = $region29
    $region28: #{tpu_custom_call.1} parent=1 // pred_region
      %vm68 = vcmask 7168
      %69 = vst.msk [vmem:[#allocation2] sm:$0xff] %vm68, 0.0
    $region29: #{tpu_custom_call.1} parent=1 // pred_fallthru
      _
    %p70 = scmp.eq.s32.totalorder 0, 0
    %p71 = pnand %p70, %p64
    %p72 = pneg %p71
    // Predicated region
    $region30: #{tpu_custom_call.1} parent=1 // pred_check
      _
    $region31: #{tpu_custom_call.1} parent=1 // pred_check_branch
      %74 = sbr.rel (%p71) target = $region33
    $region32: #{tpu_custom_call.1} parent=1 // pred_region
      %v75 = vld [vmem:[#allocation3] sm:$0xff]
      %v76 = vld [vmem:[#allocation6] sm:$0xff]
      %v77 = vmax.f32 %v75, 0.0
      %v78 = vmul.f32 %v75, %v76
      %v79 = vsub.f32 %v77, %v78
      %v80 = vand.u32 2147483647, %v75
      %v81 = vsub.f32 0.0, %v80
      %v82 = vmul.f32 %v81, 1.442695
      %v83 = vpow.pop %v82
      %v84 = vadd.f32 %v83, 1.0
      %v85 = vlog2.pop %v84
      %v86 = vmul.f32 %v85, 0.6931472
      %v87 = vmul.f32 -0.5, %v83
      %v88 = vadd.f32 %v87, 1.0
      %v89 = vmul.f32 %v88, %v83
      %v90 = vand.u32 2147483647, %v83
      %vm91 = vcmp.lt.f32.partialorder %v90, 0.0004427343
      %v92 = vsel %vm91, %v89, %v86
      %v93 = vadd.f32 %v79, %v92
      %v94 = vld [vmem:[#allocation2] sm:$0x1]
      %v96 = vperm.slane %v93, 0
      %v97 = vperm.slane %v93, 1
      %v98 = vperm.slane %v93, 2
      %v99 = vperm.slane %v93, 3
      %v100 = vperm.slane %v93, 4
      %v101 = vperm.slane %v93, 5
      %v102 = vperm.slane %v93, 6
      %v103 = vperm.slane %v93, 7
      %vm112 = vcmask 1040384
      %v113 = vsel %vm112, %v96, 0.0
      %v114 = vsel %vm112, %v97, 0.0
      %v115 = vadd.f32 %v113, %v114
      %v116 = vsel %vm112, %v98, 0.0
      %v117 = vadd.f32 %v115, %v116
      %v118 = vsel %vm112, %v99, 0.0
      %v119 = vadd.f32 %v117, %v118
      %v120 = vsel %vm112, %v100, 0.0
      %v121 = vadd.f32 %v119, %v120
      %v122 = vsel %vm112, %v101, 0.0
      %v123 = vadd.f32 %v121, %v122
      %v124 = vsel %vm112, %v102, 0.0
      %v125 = vadd.f32 %v123, %v124
      %v126 = vsel %vm112, %v103, 0.0
      %v127 = vadd.f32 %v125, %v126
      %128 = vadd.xlane.f32.xlu0 %v127
      %v129 = vpop.xlane.xlu0 %128
      %v130 = vrot.slane %v129, 4
      %v131 = vadd.f32 %v129, %v130
      %v132 = vrot.slane %v131, 2
      %v133 = vadd.f32 %v131, %v132
      %v134 = vrot.slane %v133, 1
      %v135 = vadd.f32 %v133, %v134
      %s136 = vtos %v135
      %v137 = vstv %s136
      %v138 = vadd.f32 %v94, %v137
      %vm139 = vcmask 0
      %140 = vst.msk [vmem:[#allocation2] sm:$0x1] %vm139, %v138
    $region33: #{tpu_custom_call.1} parent=1 // pred_fallthru
      _
    %v141 = vld [vmem:[#allocation8] sm:$0xff]
    %s142 = sadd.s32 0, 0
    %v143 = vlaneseq
    %v144 = vshrl.u32 %v143, 7
    %s145 = smul.u32 %s142, 8
    %v146 = vstv %s145
    %v147 = vadd.s32 %v146, %v144
    %vm148 = vcmp.lt.s32.totalorder %v147, 8
    %vm149 = vcmask 64512
    %v150 = vsel %vm149, %v141, -inf
    %151 = vmax.xlane.f32.xlu0 %v150
    %v152 = vpop.xlane.xlu0 %151
    %v153 = vsub.f32 %v141, %v152
    %v154 = vmul.f32 %v153, 1.442695
    %v155 = vpow.pop %v154
    %v156 = vsel %vm149, %v155, 0.0
    %157 = vadd.xlane.f32.xlu0 %v156
    %v158 = vpop.xlane.xlu0 %157
    %v159 = vlog2.pop %v158
    %v160 = vmul.f32 %v159, 0.6931472
    %v161 = vadd.f32 %v152, %v160
    %v162 = vlaneseq
    %v163 = vand.u32 %v162, 127
    %vm164 = vcmp.eq.s32.totalorder %v163, %v147
    %v165 = vsel %vm164, %v141, 0.0
    %v166 = vsel %vm149, %v165, 0.0
    %167 = vadd.xlane.f32.xlu0 %v166
    %v168 = vpop.xlane.xlu0 %167
    %v169 = vld [vmem:[#allocation2] sm:$0xff]
    %v170 = vsub.f32 %v161, %v168
    %v171 = vsel %vm148, %v170, 0.0
    %v172 = vadd.f32 %v169, %v171
    %vm173 = vcmask 7168
    %174 = vst.msk [vmem:[#allocation2] sm:$0xff] %vm173, %v172
    // Predicated region
    $region34: #{tpu_custom_call.1} parent=1 // pred_check
      %p175 = pneg %p64
    $region35: #{tpu_custom_call.1} parent=1 // pred_check_branch
      %177 = sbr.rel (%p175) target = $region37
    $region36: #{tpu_custom_call.1} parent=1 // pred_region
      %v178 = vld [vmem:[#allocation2] sm:$0xff]
      %v179 = vsel %vm173, %v178, 0.0
      %180 = vadd.xlane.f32.xlu0 %v179
      %v181 = vpop.xlane.xlu0 %180
      %v182 = vrot.slane %v181, 4
      %v183 = vadd.f32 %v181, %v182
      %v184 = vrot.slane %v183, 2
      %v185 = vadd.f32 %v183, %v184
      %v186 = vrot.slane %v185, 1
      %v187 = vadd.f32 %v185, %v186
      %s188 = vtos %v187
      %v189 = vstv %s188
      %v190 = vmul.f32 %v189, 0.125
      %vm191 = vcmask 0
      %192 = vst.msk [vmem:[#allocation9] sm:$0x1] %vm191, %v190
    $region37: #{tpu_custom_call.1} parent=1 // pred_fallthru
      _
    // Predicated region
    $region38: #{tpu_custom_call.1} parent=1 // pred_check
      _
    $region39: #{tpu_custom_call.1} parent=1 // pred_check_branch
      %194 = sbr.rel (0) target = $region41
    $region40: #{tpu_custom_call.1} parent=1 // pred_region
      %196 = vsyncadd [#allocation5], 0
      %s198 = sshll.u32 [#allocation9], 4
      %s199 = int_to_ptr.vmem [resolvable:$true] %s198
      %s200 = sshll.u32 %s3, 4
      %s201 = int_to_ptr.hbm [resolvable:$true] %s200
      %203 = dma.vmem_to_hbm [thread:$0]  %s199, 16, %s201, [#allocation5]
    $region41: #{tpu_custom_call.1} parent=1 // pred_fallthru
      _
    // Predicated region
    $region42: #{tpu_custom_call.1} parent=1 // pred_check
      _
    $region43: #{tpu_custom_call.1} parent=1 // pred_check_branch
      %205 = sbr.rel (0) target = $region45
    $region44: #{tpu_custom_call.1} parent=1 // pred_region
      %207 = dma.done [#allocation5], 16
    $region45: #{tpu_custom_call.1} parent=1 // pred_fallthru
      _
    %208 = vsyncpa [#allocation4], 1
    %209 = vsyncpa [#allocation7], 1
    %210 = vsyncpa [#allocation5], 1

</llo_original>
